<compile_context>
chip_gen: v5e
topology: v5e:2x2
jax: 0.10.0
libtpu: 0.0.40
codegen_flags: <defaults>
</compile_context>

<pallas_src>
import functools

import jax
import jax.numpy as jnp
from jax.experimental import pallas as pl
from jax.experimental.pallas import tpu as pltpu


def _lane_pad(n):
    return ((n + 127) // 128) * 128


def _sublane_pad(n):
    return ((n + 7) // 8) * 8


def qvalue_kernel(x_ref, w1_ref, b1_ref, w2_ref, b2_ref, o_ref):
    # In-kernel cast: x streams HBM in its stored dtype (no wrapper convert).
    x = x_ref[...].astype(w1_ref.dtype)
    # Layer 1: MXU matmul with f32 accumulation; bias + ReLU in f32 on the VPU.
    h = jnp.dot(x, w1_ref[...], preferred_element_type=jnp.float32)
    h = jnp.maximum(h + b1_ref[...], 0.0)
    # Layer 2: explicit cast of the activation to the weight dtype, f32 acc.
    q = jnp.dot(h.astype(w2_ref.dtype), w2_ref[...],
                preferred_element_type=jnp.float32)
    o_ref[...] = (q + b2_ref[...]).astype(o_ref.dtype)


def _padded_row_bytes(state_dim, hidden_dim, action_dim, x_itemsize,
                      out_itemsize):
    """VMEM bytes per batch row, accounting for 128-lane padding and
    double-buffered x/out tiles plus in-kernel activation temps."""
    return (2 * _lane_pad(state_dim) * x_itemsize        # x tile, 2 buffers
            + 2 * _lane_pad(action_dim) * out_itemsize   # out tile, 2 buffers
            + _lane_pad(hidden_dim) * 4                  # f32 hidden act
            + _lane_pad(hidden_dim) * 2                  # bf16 act copy
            + _lane_pad(state_dim) * 2)                  # bf16 x copy


@functools.partial(jax.jit, static_argnames=("block_batch",
                                             "vmem_budget_bytes"))
def qvalue_forward(x, w1, b1, w2, b2, *, block_batch=16384,
                   vmem_budget_bytes=24 * 1024 * 1024):
    batch, state_dim = x.shape
    hidden_dim, action_dim = w2.shape
    out_dtype = x.dtype
    out_itemsize = jnp.dtype(out_dtype).itemsize

    # --- batch tile sized against the lane-padded VMEM footprint -----------
    per_row = _padded_row_bytes(state_dim, hidden_dim, action_dim,
                                x.dtype.itemsize, out_itemsize)
    tb = max(8, min(block_batch, batch, vmem_budget_bytes // per_row))
    if tb < batch:
        tb = max(8, (tb // 8) * 8)      # sublane rule when tiling the batch
    grid = (pl.cdiv(batch, tb),)

    # Explicit VMEM limit: generous headroom over the estimate, capped well
    # below v7x's 64 MiB-per-TC physical VMEM (also raises v5e's 16 MiB
    # default scope when big tiles are requested).
    weight_bytes = (
        _sublane_pad(state_dim) * _lane_pad(hidden_dim) * w1.dtype.itemsize
        + _sublane_pad(hidden_dim) * _lane_pad(action_dim) * w2.dtype.itemsize
        + 8 * _lane_pad(hidden_dim) * 4
        + 8 * _lane_pad(action_dim) * 4)
    est_bytes = tb * per_row + weight_bytes
    vmem_limit = int(min(48 * 1024 * 1024,
                         max(16 * 1024 * 1024, 2 * est_bytes)))

    def resident(shape):
        return pl.BlockSpec(shape, lambda i: (0,) * len(shape))

    return pl.pallas_call(
        qvalue_kernel,
        out_shape=jax.ShapeDtypeStruct((batch, action_dim), out_dtype),
        grid=grid,
        in_specs=[
            pl.BlockSpec((tb, state_dim), lambda i: (i, 0)),  # x: batch-tiled
            resident((state_dim, hidden_dim)),                # W1: VMEM-resident
            resident((1, hidden_dim)),                        # b1
            resident((hidden_dim, action_dim)),               # W2
            resident((1, action_dim)),                        # b2
        ],
        out_specs=pl.BlockSpec((tb, action_dim), lambda i: (i, 0)),
        compiler_params=pltpu.CompilerParams(
            dimension_semantics=("parallel",),   # v7x: 2 TCs share the batch
            vmem_limit_bytes=vmem_limit,
        ),
    )(x, w1, b1, w2, b2)


def prepare_params(w1, b1, w2, b2, compute_dtype=jnp.bfloat16):
    """Cast once (store in the train state): weights in the MXU compute dtype,
    biases in f32.  Keeps per-call convert ops out of qvalue_forward."""
    return (w1.astype(compute_dtype), b1.astype(jnp.float32),
            w2.astype(compute_dtype), b2.astype(jnp.float32))


def init_params(key, state_dim, hidden_dim, action_dim, dtype=jnp.float32):
    """Deterministic init mimicking torch.nn.Linear default:
    U(-1/sqrt(fan_in), +1/sqrt(fan_in)) for both weight and bias."""
    k1, k2, k3, k4 = jax.random.split(key, 4)
    bound1 = 1.0 / jnp.sqrt(jnp.asarray(state_dim, dtype))
    bound2 = 1.0 / jnp.sqrt(jnp.asarray(hidden_dim, dtype))
    w1 = jax.random.uniform(k1, (state_dim, hidden_dim), dtype, -bound1, bound1)
    b1 = jax.random.uniform(k2, (1, hidden_dim), dtype, -bound1, bound1)
    w2 = jax.random.uniform(k3, (hidden_dim, action_dim), dtype, -bound2, bound2)
    b2 = jax.random.uniform(k4, (1, action_dim), dtype, -bound2, bound2)
    return w1, b1, w2, b2


if __name__ == "__main__":
    batch, state_dim, hidden_dim, action_dim = 8, 16, 32, 4

    key = jax.random.PRNGKey(0)
    key_x, key_p, key_x2 = jax.random.split(key, 3)
    x = jax.random.normal(key_x, (batch, state_dim), jnp.float32)
    w1, b1, w2, b2 = init_params(key_p, state_dim, hidden_dim, action_dim)
    w1c, b1c, w2c, b2c = prepare_params(w1, b1, w2, b2)

    out = jax.block_until_ready(qvalue_forward(x, w1c, b1c, w2c, b2c))
    assert out.shape == (batch, action_dim)

    # Reference 1: matched precision (bf16 operands, f32 accumulation).
    xb = x.astype(jnp.bfloat16)
    h_ref = jnp.maximum(
        jnp.dot(xb, w1c, preferred_element_type=jnp.float32) + b1c, 0.0)
    ref_matched = jnp.dot(h_ref.astype(jnp.bfloat16), w2c,
                          preferred_element_type=jnp.float32) + b2c
    assert jnp.allclose(out, ref_matched, atol=1e-4, rtol=1e-4)

    # Reference 2: pure-f32 PyTorch-equivalent forward (loose bf16 tolerance).
    ref_f32 = jnp.maximum(x @ w1 + b1, 0.0) @ w2 + b2
    assert jnp.allclose(out, ref_f32, atol=5e-2, rtol=5e-2)

    # Ragged-batch check: batch % tile != 0 -> grid of 2, masked last tile.
    x2 = jax.random.normal(key_x2, (13, state_dim), jnp.float32)
    out2 = jax.block_until_ready(
        qvalue_forward(x2, w1c, b1c, w2c, b2c, block_batch=8))
    ref2 = jnp.maximum(x2 @ w1 + b1, 0.0) @ w2 + b2
    assert out2.shape == (13, action_dim)
    assert jnp.allclose(out2, ref2, atol=5e-2, rtol=5e-2)

    print("KERNEL_OK")
</pallas_src>

<mosaic_0001>
module attributes {stable_mosaic.version = 11 : i64} {
  func.func @qvalue_kernel(%arg0: i32, %arg1: memref<8x16xf32, #tpu.memory_space<vmem>>, %arg2: memref<16x32xbf16, #tpu.memory_space<vmem>>, %arg3: memref<1x32xf32, #tpu.memory_space<vmem>>, %arg4: memref<32x4xbf16, #tpu.memory_space<vmem>>, %arg5: memref<1x4xf32, #tpu.memory_space<vmem>>, %arg6: memref<8x4xf32, #tpu.memory_space<vmem>>) attributes {dimension_semantics = [#tpu.dimension_semantics<parallel>], iteration_bounds = array<i64: 1>, scalar_prefetch = 0 : i64, scratch_operands = 0 : i64, tpu.core_type = #tpu.core_type<tc>, window_params = [{transform_indices = @transform_0, window_bounds = array<i64: 8, 16>}, {pipeline_mode = #tpu.pipeline_mode<synchronous>, transform_indices = @transform_1, window_bounds = array<i64: 16, 32>}, {pipeline_mode = #tpu.pipeline_mode<synchronous>, transform_indices = @transform_2, window_bounds = array<i64: 1, 32>}, {pipeline_mode = #tpu.pipeline_mode<synchronous>, transform_indices = @transform_3, window_bounds = array<i64: 32, 4>}, {pipeline_mode = #tpu.pipeline_mode<synchronous>, transform_indices = @transform_4, window_bounds = array<i64: 1, 4>}, {transform_indices = @transform_5, window_bounds = array<i64: 8, 4>}]} {
    %c0 = arith.constant 0 : index
    %c0_0 = arith.constant 0 : index
    %0 = vector.load %arg1[%c0, %c0_0] : memref<8x16xf32, #tpu.memory_space<vmem>>, vector<8x16xf32>
    %1 = arith.truncf %0 : vector<8x16xf32> to vector<8x16xbf16>
    %c0_1 = arith.constant 0 : index
    %c0_2 = arith.constant 0 : index
    %2 = vector.load %arg2[%c0_1, %c0_2] : memref<16x32xbf16, #tpu.memory_space<vmem>>, vector<16x32xbf16>
    %cst = arith.constant dense<0.000000e+00> : vector<8x32xf32>
    %3 = tpu.matmul %1, %2, %cst {dimension_numbers = #tpu.dot_dimension_numbers<[1], [0], [0], [1], [0, 0, 1, 1], [], []>} : vector<8x16xbf16>, vector<16x32xbf16>, vector<8x32xf32> -> vector<8x32xf32>
    %c0_3 = arith.constant 0 : index
    %c0_4 = arith.constant 0 : index
    %4 = vector.load %arg3[%c0_3, %c0_4] : memref<1x32xf32, #tpu.memory_space<vmem>>, vector<1x32xf32>
    %5 = vector.broadcast %4 : vector<1x32xf32> to vector<8x32xf32>
    %6 = arith.addf %3, %5 : vector<8x32xf32>
    %cst_5 = arith.constant 0.000000e+00 : f32
    %7 = vector.broadcast %cst_5 : f32 to vector<8x32xf32>
    %8 = arith.maximumf %6, %7 : vector<8x32xf32>
    %9 = arith.truncf %8 : vector<8x32xf32> to vector<8x32xbf16>
    %c0_6 = arith.constant 0 : index
    %c0_7 = arith.constant 0 : index
    %10 = vector.load %arg4[%c0_6, %c0_7] : memref<32x4xbf16, #tpu.memory_space<vmem>>, vector<32x4xbf16>
    %cst_8 = arith.constant dense<0.000000e+00> : vector<8x4xf32>
    %11 = tpu.matmul %9, %10, %cst_8 {dimension_numbers = #tpu.dot_dimension_numbers<[1], [0], [0], [1], [0, 0, 1, 1], [], []>} : vector<8x32xbf16>, vector<32x4xbf16>, vector<8x4xf32> -> vector<8x4xf32>
    %c0_9 = arith.constant 0 : index
    %c0_10 = arith.constant 0 : index
    %12 = vector.load %arg5[%c0_9, %c0_10] : memref<1x4xf32, #tpu.memory_space<vmem>>, vector<1x4xf32>
    %13 = vector.broadcast %12 : vector<1x4xf32> to vector<8x4xf32>
    %14 = arith.addf %11, %13 : vector<8x4xf32>
    %c0_11 = arith.constant 0 : index
    %c0_12 = arith.constant 0 : index
    %15 = vector.load %arg6[%c0_11, %c0_12] : memref<8x4xf32, #tpu.memory_space<vmem>>, vector<8x4xf32>
    tpu.vector_store %arg6[%c0_11, %c0_12], %14 {strides = array<i32>} : memref<8x4xf32, #tpu.memory_space<vmem>>, vector<8x4xf32>,
    return
  }
  func.func @transform_0(%arg0: i32) -> (i32, i32) {
    %c0_i32 = arith.constant 0 : i32
    %c0_i32_0 = arith.constant 0 : i32
    return %arg0, %c0_i32 : i32, i32
  }
  func.func @transform_1(%arg0: i32) -> (i32, i32) {
    %c0_i32 = arith.constant 0 : i32
    %c0_i32_0 = arith.constant 0 : i32
    %c0_i32_1 = arith.constant 0 : i32
    return %c0_i32, %c0_i32_0 : i32, i32
  }
  func.func @transform_2(%arg0: i32) -> (i32, i32) {
    %c0_i32 = arith.constant 0 : i32
    %c0_i32_0 = arith.constant 0 : i32
    %c0_i32_1 = arith.constant 0 : i32
    return %c0_i32, %c0_i32_0 : i32, i32
  }
  func.func @transform_3(%arg0: i32) -> (i32, i32) {
    %c0_i32 = arith.constant 0 : i32
    %c0_i32_0 = arith.constant 0 : i32
    %c0_i32_1 = arith.constant 0 : i32
    return %c0_i32, %c0_i32_0 : i32, i32
  }
  func.func @transform_4(%arg0: i32) -> (i32, i32) {
    %c0_i32 = arith.constant 0 : i32
    %c0_i32_0 = arith.constant 0 : i32
    %c0_i32_1 = arith.constant 0 : i32
    return %c0_i32, %c0_i32_0 : i32, i32
  }
  func.func @transform_5(%arg0: i32) -> (i32, i32) {
    %c0_i32 = arith.constant 0 : i32
    %c0_i32_0 = arith.constant 0 : i32
    return %arg0, %c0_i32 : i32, i32
  }
}

</mosaic_0001>

<llo_original>
// kernel: qvalue_forward.1
$region0: #{qvalue_forward.1}
  #allocation0 [shape = 'u32[]', space=smem, size = 0x4, offset = 0x4, fixed_abs, tag = 'smem constant byte address 0x4 - core index']
  #allocation1 [shape = 'u32[72,128]{1,0:T(1,128)}', space=vmem, size = 0x9000, scoped, tag = 'internal scratch']
  %s0 = inlined_call_operand.vmem [shape: f32[8,16], index: 0, kind: input, shape index: {}]
  %s1 = inlined_call_operand.vmem [shape: bf16[16,32], index: 1, kind: input, shape index: {}]
  %s2 = inlined_call_operand.vmem [shape: f32[1,32], index: 2, kind: input, shape index: {}]
  %s3 = inlined_call_operand.vmem [shape: bf16[32,4], index: 3, kind: input, shape index: {}]
  %s4 = inlined_call_operand.vmem [shape: f32[1,4], index: 4, kind: input, shape index: {}]
  %s5 = inlined_call_operand.vmem [shape: f32[8,4], index: 5, kind: output, shape index: {}]
  %s6 = sld [smem:[#allocation0]]
  $region30: #{qvalue_forward.1} parent=0
    _
  %s8 = ssub.s32 1, %s6
  %s9 = scalar_select 0, %s8, %s6
  // Predicated region
  $region2: #{qvalue_forward.1} parent=0 // pred_check
    _
  $region3: #{qvalue_forward.1} parent=0 // pred_check_branch
    %11 = sbr.rel (0) target = $region5
  $region4: #{qvalue_forward.1} parent=0 // pred_region
    _
  $region5: #{qvalue_forward.1} parent=0 // pred_fallthru
    _
  // Predicated region
  $region6: #{qvalue_forward.1} parent=0 // pred_check
    _
  $region7: #{qvalue_forward.1} parent=0 // pred_check_branch
    %13 = sbr.rel (0) target = $region9
  $region8: #{qvalue_forward.1} parent=0 // pred_region
    _
  $region9: #{qvalue_forward.1} parent=0 // pred_fallthru
    _
  // Predicated region
  $region10: #{qvalue_forward.1} parent=0 // pred_check
    _
  $region11: #{qvalue_forward.1} parent=0 // pred_check_branch
    %15 = sbr.rel (0) target = $region13
  $region12: #{qvalue_forward.1} parent=0 // pred_region
    _
  $region13: #{qvalue_forward.1} parent=0 // pred_fallthru
    _
  // Predicated region
  $region14: #{qvalue_forward.1} parent=0 // pred_check
    _
  $region15: #{qvalue_forward.1} parent=0 // pred_check_branch
    %17 = sbr.rel (0) target = $region17
  $region16: #{qvalue_forward.1} parent=0 // pred_region
    _
  $region17: #{qvalue_forward.1} parent=0 // pred_fallthru
    _
  // Predicated region
  $region18: #{qvalue_forward.1} parent=0 // pred_check
    _
  $region19: #{qvalue_forward.1} parent=0 // pred_check_branch
    %19 = sbr.rel (0) target = $region21
  $region20: #{qvalue_forward.1} parent=0 // pred_region
    _
  $region21: #{qvalue_forward.1} parent=0 // pred_fallthru
    _
  %v21 = vld [vmem:[%s0] sm:$0xff]
  %v22 = vpack.c.bf16 %v21, %v21
  %v23 = vld [vmem:[%s1] sm:$0xf]
  %v24 = vld [vmem:[%s1 + $0x4] sm:$0xf]
  %v25 = vld [vmem:[%s2] sm:$0x1]
  %v27 = vperm.slane %v25, 0
  %v31 = vunpack.c.l.b16 %v23
  %v32 = vunpack.c.l.b16 %v24
  %v33 = vpack.c.b16 %v32, %v31
  %vm35 = vcmask 130048
  %v37 = vsel %vm35, %v22, 0
  %39 = vmatpush.bf16.msra.mxu0 0
  %40 = vmatpush.bf16.msra.mxu0 0
  %41 = vmatpush.bf16.msra.mxu0 0
  %42 = vmatpush.bf16.msra.mxu0 0
  %43 = vmatpush.bf16.msra.mxu0 0
  %44 = vmatpush.bf16.msra.mxu0 0
  %45 = vmatpush.bf16.msra.mxu0 0
  %46 = vmatpush.bf16.msra.mxu0 %v33
  %47 = vmatmul.bf16.gmra.mxu0 %v37
  %v48 = vpop.f32.mrf.mxu0
  %v49 = vadd.f32 %v27, %v48
  %v50 = vpop.f32.mrf.mxu0
  %51 = vdwg.mxu0
  %v52 = vmax.f32 %v49, 0.0
  %v53 = vpack.c.bf16 %v52, %v52
  %v54 = vld [vmem:[%s3] sm:$0xf]
  %v55 = vld [vmem:[%s3 + $0x4] sm:$0xf]
  %v56 = vld [vmem:[%s3 + $0x8] sm:$0xf]
  %v57 = vld [vmem:[%s3 + $0xc] sm:$0xf]
  %v58 = vld [vmem:[%s4] sm:$0x1]
  %v60 = vperm.slane %v58, 0
  %v66 = vunpack.c.l.b16 %v54
  %v67 = vunpack.c.l.b16 %v55
  %v68 = vunpack.c.l.b16 %v56
  %v69 = vunpack.c.l.b16 %v57
  %v70 = vpack.c.b16 %v67, %v66
  %v71 = vpack.c.b16 %v69, %v68
  %vm74 = vcmask 261120
  %v76 = vsel %vm74, %v53, 0
  %78 = vmatpush.bf16.msra.mxu0 0
  %79 = vmatpush.bf16.msra.mxu0 0
  %80 = vmatpush.bf16.msra.mxu0 0
  %81 = vmatpush.bf16.msra.mxu0 0
  %82 = vmatpush.bf16.msra.mxu0 0
  %83 = vmatpush.bf16.msra.mxu0 0
  %84 = vmatpush.bf16.msra.mxu0 %v71
  %85 = vmatpush.bf16.msra.mxu0 %v70
  %86 = vmatmul.bf16.gmra.mxu0 %v76
  %v87 = vpop.f32.mrf.mxu0
  %v88 = vadd.f32 %v60, %v87
  %v89 = vpop.f32.mrf.mxu0
  %90 = vdwg.mxu0
  %vm91 = vcmask 31744
  %92 = vst.msk [vmem:[%s5] sm:$0xff] %vm91, %v88
  // Predicated region
  $region22: #{qvalue_forward.1} parent=0 // pred_check
    _
  $region23: #{qvalue_forward.1} parent=0 // pred_check_branch
    %94 = sbr.rel (0) target = $region25
  $region24: #{qvalue_forward.1} parent=0 // pred_region
    _
  $region25: #{qvalue_forward.1} parent=0 // pred_fallthru
    _
  // Predicated region
  $region26: #{qvalue_forward.1} parent=0 // pred_check
    _
  $region27: #{qvalue_forward.1} parent=0 // pred_check_branch
    %96 = sbr.rel (0) target = $region29
  $region28: #{qvalue_forward.1} parent=0 // pred_region
    _
  $region29: #{qvalue_forward.1} parent=0 // pred_fallthru
    _

</llo_original>
